<compile_context>
chip_gen: v7x
topology: tpu7x:2x2x1
jax: 0.10.0
libtpu: 0.0.40
codegen_flags: <defaults>
</compile_context>

<pallas_src>
import jax
import jax.numpy as jnp
import numpy as np
from jax.experimental import pallas as pl
from jax.experimental.pallas import tpu as pltpu

LN_EPS = 1e-5
NEG_SLOPE = 0.2
OUT_DTYPE = jnp.float32          # jnp.bfloat16 halves writeback (semantics change)
_PT_VMEM_BUDGET = 40 << 20       # per-step block budget; fits v7x's 64 MiB VMEM


# ---------------------------------------------------------------------------
# Kernel A: conv matmul (+bias) and per-channel LayerNorm partial statistics.
# ---------------------------------------------------------------------------
def _conv_stats_kernel(p_ref, w_ref, b_ref, y_ref, s_ref, ss_ref):
    # p_ref : (1, K, Pt)    bf16 im2col patches (P tile on the 128-lane axis)
    # w_ref : (Cout, K)     bf16 flattened conv weight (channel-major, offset-minor)
    # b_ref : (Cout, 1)     f32 conv bias
    # y_ref : (1, Cout, Pt) f32 pre-norm conv output (channel-major)
    # s_ref / ss_ref : (1, Cout, 1) f32 per-channel sum / sum-of-squares,
    #                  accumulated across the "arbitrary" P-tile grid axis.
    pt = pl.program_id(1)

    @pl.when(pt == 0)
    def _():
        s_ref[...] = jnp.zeros_like(s_ref)
        ss_ref[...] = jnp.zeros_like(ss_ref)

    # Conv3d as one lane-dense MXU matmul with f32 accumulation.
    y = jnp.dot(w_ref[...], p_ref[0], preferred_element_type=jnp.float32)
    y = y + b_ref[...]                                   # bias broadcast over lanes
    y_ref[0] = y

    # Lane-only (XLU) partial reductions; cross-channel collapse happens in XLA.
    s_ref[0] += jnp.sum(y, axis=-1, keepdims=True)
    ss_ref[0] += jnp.sum(y * y, axis=-1, keepdims=True)


# ---------------------------------------------------------------------------
# Kernel B: y * scale + shift  ->  LeakyReLU(0.2).   Fully parallel grid.
# ---------------------------------------------------------------------------
def _norm_act_kernel(y_ref, scale_ref, shift_ref, o_ref):
    yn = y_ref[0] * scale_ref[0] + shift_ref[0]          # (Cout, Pt), FMA
    o_ref[0] = jnp.maximum(yn, NEG_SLOPE * yn).astype(o_ref.dtype)


# ---------------------------------------------------------------------------
# Host-side helpers.
# ---------------------------------------------------------------------------
def _im2col_3d(x, k=4, stride=2, pad=1):
    """x: (N, Cin, D, H, W) -> patches (N, Cin*k^3, P) with P = Do*Ho*Wo last."""
    N, Cin, D, H, W = x.shape
    Do = (D + 2 * pad - k) // stride + 1
    Ho = (H + 2 * pad - k) // stride + 1
    Wo = (W + 2 * pad - k) // stride + 1
    xp = jnp.pad(x, ((0, 0), (0, 0), (pad, pad), (pad, pad), (pad, pad)))
    slabs = []
    for kd in range(k):
        for kh in range(k):
            for kw in range(k):
                slabs.append(
                    xp[:, :,
                       kd:kd + stride * Do:stride,
                       kh:kh + stride * Ho:stride,
                       kw:kw + stride * Wo:stride])          # (N, Cin, Do, Ho, Wo)
    # (Cin, k^3) flattens in the same order as conv_w.reshape(Cout, Cin*k^3);
    # spatial dims flatten last (lane axis) -> no transpose anywhere.
    pat = jnp.stack(slabs, axis=2)
    pat = pat.reshape(N, Cin * k ** 3, Do * Ho * Wo)          # (N, K, P)
    return pat, (Do, Ho, Wo)


def _choose_pt(P, K, Cout):
    """Largest P tile (multiple of 128 dividing P, or P itself) within budget."""
    def footprint(pt):
        return (2 * K * pt * 2            # patches block, double-buffered, bf16
                + 2 * Cout * pt * 4       # y block, double-buffered, f32
                + 2 * Cout * K * 2        # resident weights (counted 2x for safety)
                + 4096)
    if footprint(P) <= _PT_VMEM_BUDGET or P % 128 != 0:
        return P                          # single tile (block == full dim is legal)
    for ntiles in range(2, P // 128 + 1):
        if P % ntiles == 0:
            pt = P // ntiles
            if pt % 128 == 0 and footprint(pt) <= _PT_VMEM_BUDGET:
                return pt
    # TODO(synk): masked edge tiles for P with no lane-aligned divisor.
    return P


def _vmem_limit(block_bytes):
    phys = 64 << 20                       # conservative (v7x) fallback
    try:
        phys = int(pltpu.get_tpu_info().vmem_capacity_bytes)
    except Exception:
        pass
    want = int(block_bytes * 1.25) + (8 << 20)
    return max(32 << 20, min(want, int(phys * 0.8)))


@jax.jit
def encoder_block_forward(x, conv_w, conv_b):
    """x: (N, Cin, D, H, W).  conv_w: (Cout, Cin, 4, 4, 4).  conv_b: (Cout,)."""
    N, Cin, D, H, W = x.shape
    Cout = conv_w.shape[0]
    K = Cin * 4 * 4 * 4

    # bf16 cast BEFORE im2col: halves the materialized patches intermediate.
    patches, (Do, Ho, Wo) = _im2col_3d(x.astype(jnp.bfloat16))   # (N, K, P) bf16
    P = Do * Ho * Wo
    Pt = _choose_pt(P, K, Cout)
    n_pt = P // Pt

    w_mat = conv_w.reshape(Cout, K).astype(jnp.bfloat16)          # (Cout, K)
    b_mat = conv_b.reshape(Cout, 1).astype(jnp.float32)           # (Cout, 1)

    # ---- pass A: conv matmul + LN partial stats ---------------------------
    block_a = 2 * K * Pt * 2 + 2 * Cout * Pt * 4 + 2 * Cout * K * 2
    cost_a = pl.CostEstimate(
        flops=2 * N * P * K * Cout + 3 * N * Cout * P,
        transcendentals=0,
        bytes_accessed=(N * K * P * 2 + Cout * K * 2 + Cout * 4
                        + N * Cout * P * 4 + 2 * N * Cout * 4))
    y, s, ss = pl.pallas_call(
        _conv_stats_kernel,
        out_shape=(jax.ShapeDtypeStruct((N, Cout, P), jnp.float32),
                   jax.ShapeDtypeStruct((N, Cout, 1), jnp.float32),
                   jax.ShapeDtypeStruct((N, Cout, 1), jnp.float32)),
        grid_spec=pltpu.PrefetchScalarGridSpec(
            num_scalar_prefetch=0,
            grid=(N, n_pt),
            in_specs=[
                pl.BlockSpec((1, K, Pt), lambda n, p: (n, 0, p)),
                pl.BlockSpec((Cout, K), lambda n, p: (0, 0)),
                pl.BlockSpec((Cout, 1), lambda n, p: (0, 0)),
            ],
            out_specs=(
                pl.BlockSpec((1, Cout, Pt), lambda n, p: (n, 0, p)),
                pl.BlockSpec((1, Cout, 1), lambda n, p: (n, 0, 0)),
                pl.BlockSpec((1, Cout, 1), lambda n, p: (n, 0, 0)),
            )),
        compiler_params=pltpu.CompilerParams(
            dimension_semantics=("parallel", "arbitrary"),
            vmem_limit_bytes=_vmem_limit(block_a),
            allow_input_fusion=[True, False, False]),
        cost_estimate=cost_a,
    )(patches, w_mat, b_mat)

    # ---- LN finalization (tiny per-image scalars; XLA) --------------------
    n_elems = float(Cout * P)
    tot_s = jnp.sum(s[:, :, 0], axis=1)
    tot_ss = jnp.sum(ss[:, :, 0], axis=1)
    mean = tot_s / n_elems
    var = jnp.maximum(tot_ss / n_elems - mean * mean, 0.0)   # cancellation guard
    inv = jax.lax.rsqrt(var + LN_EPS)
    # gamma=1, beta=0 (LayerNorm re-created every forward in the module).
    scale = jnp.broadcast_to(inv[:, None, None], (N, Cout, 1)).astype(jnp.float32)
    shift = jnp.broadcast_to((-mean * inv)[:, None, None],
                             (N, Cout, 1)).astype(jnp.float32)

    # ---- pass B: normalize + LeakyReLU (fully parallel) -------------------
    out_bytes = jnp.dtype(OUT_DTYPE).itemsize
    block_b = 2 * Cout * Pt * 4 + 2 * Cout * Pt * out_bytes
    cost_b = pl.CostEstimate(
        flops=3 * N * Cout * P,
        transcendentals=0,
        bytes_accessed=N * Cout * P * (4 + out_bytes) + 2 * N * Cout * 4)
    out = pl.pallas_call(
        _norm_act_kernel,
        out_shape=jax.ShapeDtypeStruct((N, Cout, P), OUT_DTYPE),
        grid_spec=pltpu.PrefetchScalarGridSpec(
            num_scalar_prefetch=0,
            grid=(N, n_pt),
            in_specs=[
                pl.BlockSpec((1, Cout, Pt), lambda n, p: (n, 0, p)),
                pl.BlockSpec((1, Cout, 1), lambda n, p: (n, 0, 0)),
                pl.BlockSpec((1, Cout, 1), lambda n, p: (n, 0, 0)),
            ],
            out_specs=pl.BlockSpec((1, Cout, Pt), lambda n, p: (n, 0, p))),
        compiler_params=pltpu.CompilerParams(
            dimension_semantics=("parallel", "parallel"),
            vmem_limit_bytes=_vmem_limit(block_b)),
        cost_estimate=cost_b,
    )(y, scale, shift)

    # (N, Cout, P) is already channel-major: reshape only, no transpose.
    return out.reshape(N, Cout, Do, Ho, Wo)


def _reference_forward(x, conv_w, conv_b, use_bf16):
    """Pure-JAX reference (conv -> layernorm -> leakyrelu).  If use_bf16, the
    conv operands are quantized to bf16 exactly like the kernel's MXU feed."""
    if use_bf16:
        xc = x.astype(jnp.bfloat16)
        wc = conv_w.astype(jnp.bfloat16)
    else:
        xc, wc = x, conv_w
    y = jax.lax.conv_general_dilated(
        xc, wc, window_strides=(2, 2, 2),
        padding=[(1, 1), (1, 1), (1, 1)],
        dimension_numbers=("NCDHW", "OIDHW", "NCDHW"),
        preferred_element_type=jnp.float32)
    y = y + conv_b[None, :, None, None, None]
    mean = y.mean(axis=(1, 2, 3, 4), keepdims=True)
    var = ((y - mean) ** 2).mean(axis=(1, 2, 3, 4), keepdims=True)
    yn = (y - mean) * jax.lax.rsqrt(var + LN_EPS)
    return jnp.where(yn >= 0, yn, NEG_SLOPE * yn)


if __name__ == "__main__":
    # Small shapes consistent with Conv3d(in=4, out=8, k=4, s=2, p=1).
    # D=H=W=16 -> Do=Ho=Wo=8 -> P=512 (lane-dense multiple of 128).
    N, Cin, Cout = 2, 4, 8
    D = H = W = 16

    key = jax.random.PRNGKey(0)
    kx, kw, kb = jax.random.split(key, 3)
    x = jax.random.normal(kx, (N, Cin, D, H, W), jnp.float32)

    # Deterministic PyTorch-style conv init: U(-1/sqrt(fan_in), 1/sqrt(fan_in)).
    fan_in = Cin * 4 * 4 * 4
    bound = 1.0 / np.sqrt(fan_in)
    conv_w = jax.random.uniform(kw, (Cout, Cin, 4, 4, 4), jnp.float32,
                                minval=-bound, maxval=bound)
    conv_b = jax.random.uniform(kb, (Cout,), jnp.float32,
                                minval=-bound, maxval=bound)

    out = jax.block_until_ready(encoder_block_forward(x, conv_w, conv_b))

    # Tight check vs a reference that feeds the conv in bf16 (what the kernel does).
    ref_bf16 = jax.block_until_ready(
        _reference_forward(x, conv_w, conv_b, use_bf16=True))
    np.testing.assert_allclose(np.asarray(out, np.float32), np.asarray(ref_bf16),
                               rtol=5e-3, atol=5e-3)

    # Loose sanity check vs the full-f32 PyTorch-semantics reference
    # (differences come only from the bf16 MXU feed).
    ref_f32 = jax.block_until_ready(
        _reference_forward(x, conv_w, conv_b, use_bf16=False))
    np.testing.assert_allclose(np.asarray(out, np.float32), np.asarray(ref_f32),
                               rtol=1e-1, atol=1e-1)

    print("KERNEL_OK")
</pallas_src>

<mosaic_0001>
module attributes {stable_mosaic.version = 11 : i64} {
  func.func @_conv_stats_kernel(%arg0: i32, %arg1: i32, %arg2: memref<1x256x512xbf16, #tpu.memory_space<vmem>>, %arg3: memref<8x256xbf16, #tpu.memory_space<vmem>>, %arg4: memref<8x1xf32, #tpu.memory_space<vmem>>, %arg5: memref<1x8x512xf32, #tpu.memory_space<vmem>>, %arg6: memref<1x8x1xf32, #tpu.memory_space<vmem>>, %arg7: memref<1x8x1xf32, #tpu.memory_space<vmem>>) attributes {dimension_semantics = [#tpu.dimension_semantics<parallel>, #tpu.dimension_semantics<arbitrary>], iteration_bounds = array<i64: 2, 1>, scalar_prefetch = 0 : i64, scratch_operands = 0 : i64, tpu.core_type = #tpu.core_type<tc>, window_params = [{transform_indices = @transform_0, window_bounds = array<i64: 1, 256, 512>}, {pipeline_mode = #tpu.pipeline_mode<synchronous>, transform_indices = @transform_1, window_bounds = array<i64: 8, 256>}, {pipeline_mode = #tpu.pipeline_mode<synchronous>, transform_indices = @transform_2, window_bounds = array<i64: 8, 1>}, {transform_indices = @transform_3, window_bounds = array<i64: 1, 8, 512>}, {transform_indices = @transform_4, window_bounds = array<i64: 1, 8, 1>}, {transform_indices = @transform_5, window_bounds = array<i64: 1, 8, 1>}]} {
    %c0_i32 = arith.constant 0 : i32
    %0 = arith.cmpi eq, %arg1, %c0_i32 : i32
    %1 = arith.extui %0 : i1 to i32
    %c0_i32_0 = arith.constant 0 : i32
    %2 = arith.cmpi ne, %1, %c0_i32_0 : i32
    scf.if %2 {
      %cst_24 = arith.constant 0.000000e+00 : f32
      %30 = vector.broadcast %cst_24 : f32 to vector<1x8x1xf32>
      %c0_25 = arith.constant 0 : index
      %c0_26 = arith.constant 0 : index
      %c0_27 = arith.constant 0 : index
      %31 = vector.load %arg6[%c0_25, %c0_26, %c0_27] : memref<1x8x1xf32, #tpu.memory_space<vmem>>, vector<1x8x1xf32>
      tpu.vector_store %arg6[%c0_25, %c0_26, %c0_27], %30 {strides = array<i32>} : memref<1x8x1xf32, #tpu.memory_space<vmem>>, vector<1x8x1xf32>,
      %cst_28 = arith.constant 0.000000e+00 : f32
      %32 = vector.broadcast %cst_28 : f32 to vector<1x8x1xf32>
      %c0_29 = arith.constant 0 : index
      %c0_30 = arith.constant 0 : index
      %c0_31 = arith.constant 0 : index
      %33 = vector.load %arg7[%c0_29, %c0_30, %c0_31] : memref<1x8x1xf32, #tpu.memory_space<vmem>>, vector<1x8x1xf32>
      tpu.vector_store %arg7[%c0_29, %c0_30, %c0_31], %32 {strides = array<i32>} : memref<1x8x1xf32, #tpu.memory_space<vmem>>, vector<1x8x1xf32>,
    } else {
    }
    %c0 = arith.constant 0 : index
    %c0_1 = arith.constant 0 : index
    %3 = vector.load %arg3[%c0, %c0_1] : memref<8x256xbf16, #tpu.memory_space<vmem>>, vector<8x256xbf16>
    %c0_2 = arith.constant 0 : index
    %c0_3 = arith.constant 0 : index
    %c0_4 = arith.constant 0 : index
    %4 = vector.load %arg2[%c0_2, %c0_3, %c0_4] : memref<1x256x512xbf16, #tpu.memory_space<vmem>>, vector<1x256x512xbf16>
    %5 = vector.shape_cast %4 : vector<1x256x512xbf16> to vector<256x512xbf16>
    %cst = arith.constant dense<0.000000e+00> : vector<8x512xf32>
    %6 = tpu.matmul %3, %5, %cst {dimension_numbers = #tpu.dot_dimension_numbers<[1], [0], [0], [1], [0, 0, 1, 1], [], []>} : vector<8x256xbf16>, vector<256x512xbf16>, vector<8x512xf32> -> vector<8x512xf32>
    %c0_5 = arith.constant 0 : index
    %c0_6 = arith.constant 0 : index
    %7 = vector.load %arg4[%c0_5, %c0_6] : memref<8x1xf32, #tpu.memory_space<vmem>>, vector<8x1xf32>
    %8 = vector.broadcast %7 : vector<8x1xf32> to vector<8x512xf32>
    %9 = arith.addf %6, %8 : vector<8x512xf32>
    %c0_7 = arith.constant 0 : index
    %c0_8 = arith.constant 0 : index
    %c0_9 = arith.constant 0 : index
    %10 = vector.load %arg5[%c0_7, %c0_8, %c0_9] : memref<1x8x512xf32, #tpu.memory_space<vmem>>, vector<1x8x512xf32>
    %11 = vector.shape_cast %10 : vector<1x8x512xf32> to vector<8x512xf32>
    %12 = vector.shape_cast %9 : vector<8x512xf32> to vector<1x8x512xf32>
    tpu.vector_store %arg5[%c0_7, %c0_8, %c0_9], %12 {strides = array<i32>} : memref<1x8x512xf32, #tpu.memory_space<vmem>>, vector<1x8x512xf32>,
    %c0_10 = arith.constant 0 : index
    %c0_11 = arith.constant 0 : index
    %c0_12 = arith.constant 0 : index
    %13 = vector.load %arg6[%c0_10, %c0_11, %c0_12] : memref<1x8x1xf32, #tpu.memory_space<vmem>>, vector<1x8x1xf32>
    %14 = vector.shape_cast %13 : vector<1x8x1xf32> to vector<8x1xf32>
    %cst_13 = arith.constant dense<0.000000e+00> : vector<8xf32>
    %15 = vector.multi_reduction <add>, %9, %cst_13 [1] : vector<8x512xf32> to vector<8xf32>
    %16 = vector.shape_cast %15 : vector<8xf32> to vector<8x1xf32>
    %17 = arith.addf %14, %16 : vector<8x1xf32>
    %c0_14 = arith.constant 0 : index
    %c0_15 = arith.constant 0 : index
    %c0_16 = arith.constant 0 : index
    %18 = vector.load %arg6[%c0_14, %c0_15, %c0_16] : memref<1x8x1xf32, #tpu.memory_space<vmem>>, vector<1x8x1xf32>
    %19 = vector.shape_cast %18 : vector<1x8x1xf32> to vector<8x1xf32>
    %20 = vector.shape_cast %17 : vector<8x1xf32> to vector<1x8x1xf32>
    tpu.vector_store %arg6[%c0_14, %c0_15, %c0_16], %20 {strides = array<i32>} : memref<1x8x1xf32, #tpu.memory_space<vmem>>, vector<1x8x1xf32>,
    %c0_17 = arith.constant 0 : index
    %c0_18 = arith.constant 0 : index
    %c0_19 = arith.constant 0 : index
    %21 = vector.load %arg7[%c0_17, %c0_18, %c0_19] : memref<1x8x1xf32, #tpu.memory_space<vmem>>, vector<1x8x1xf32>
    %22 = vector.shape_cast %21 : vector<1x8x1xf32> to vector<8x1xf32>
    %23 = arith.mulf %9, %9 : vector<8x512xf32>
    %cst_20 = arith.constant dense<0.000000e+00> : vector<8xf32>
    %24 = vector.multi_reduction <add>, %23, %cst_20 [1] : vector<8x512xf32> to vector<8xf32>
    %25 = vector.shape_cast %24 : vector<8xf32> to vector<8x1xf32>
    %26 = arith.addf %22, %25 : vector<8x1xf32>
    %c0_21 = arith.constant 0 : index
    %c0_22 = arith.constant 0 : index
    %c0_23 = arith.constant 0 : index
    %27 = vector.load %arg7[%c0_21, %c0_22, %c0_23] : memref<1x8x1xf32, #tpu.memory_space<vmem>>, vector<1x8x1xf32>
    %28 = vector.shape_cast %27 : vector<1x8x1xf32> to vector<8x1xf32>
    %29 = vector.shape_cast %26 : vector<8x1xf32> to vector<1x8x1xf32>
    tpu.vector_store %arg7[%c0_21, %c0_22, %c0_23], %29 {strides = array<i32>} : memref<1x8x1xf32, #tpu.memory_space<vmem>>, vector<1x8x1xf32>,
    return
  }
  func.func @transform_0(%arg0: i32, %arg1: i32) -> (i32, i32, i32) {
    %c0_i32 = arith.constant 0 : i32
    %c0_i32_0 = arith.constant 0 : i32
    return %arg0, %c0_i32, %arg1 : i32, i32, i32
  }
  func.func @transform_1(%arg0: i32, %arg1: i32) -> (i32, i32) {
    %c0_i32 = arith.constant 0 : i32
    %c0_i32_0 = arith.constant 0 : i32
    %c0_i32_1 = arith.constant 0 : i32
    return %c0_i32, %c0_i32_0 : i32, i32
  }
  func.func @transform_2(%arg0: i32, %arg1: i32) -> (i32, i32) {
    %c0_i32 = arith.constant 0 : i32
    %c0_i32_0 = arith.constant 0 : i32
    %c0_i32_1 = arith.constant 0 : i32
    return %c0_i32, %c0_i32_0 : i32, i32
  }
  func.func @transform_3(%arg0: i32, %arg1: i32) -> (i32, i32, i32) {
    %c0_i32 = arith.constant 0 : i32
    %c0_i32_0 = arith.constant 0 : i32
    return %arg0, %c0_i32, %arg1 : i32, i32, i32
  }
  func.func @transform_4(%arg0: i32, %arg1: i32) -> (i32, i32, i32) {
    %c0_i32 = arith.constant 0 : i32
    %c0_i32_0 = arith.constant 0 : i32
    %c0_i32_1 = arith.constant 0 : i32
    return %arg0, %c0_i32, %c0_i32_0 : i32, i32, i32
  }
  func.func @transform_5(%arg0: i32, %arg1: i32) -> (i32, i32, i32) {
    %c0_i32 = arith.constant 0 : i32
    %c0_i32_0 = arith.constant 0 : i32
    %c0_i32_1 = arith.constant 0 : i32
    return %arg0, %c0_i32, %c0_i32_0 : i32, i32, i32
  }
}

module attributes {stable_mosaic.version = 11 : i64} {
  func.func @_norm_act_kernel(%arg0: i32, %arg1: i32, %arg2: memref<1x8x512xf32, #tpu.memory_space<vmem>>, %arg3: memref<1x8x1xf32, #tpu.memory_space<vmem>>, %arg4: memref<1x8x1xf32, #tpu.memory_space<vmem>>, %arg5: memref<1x8x512xf32, #tpu.memory_space<vmem>>) attributes {dimension_semantics = [#tpu.dimension_semantics<parallel>, #tpu.dimension_semantics<parallel>], iteration_bounds = array<i64: 2, 1>, scalar_prefetch = 0 : i64, scratch_operands = 0 : i64, tpu.core_type = #tpu.core_type<tc>, window_params = [{transform_indices = @transform_0, window_bounds = array<i64: 1, 8, 512>}, {transform_indices = @transform_1, window_bounds = array<i64: 1, 8, 1>}, {transform_indices = @transform_2, window_bounds = array<i64: 1, 8, 1>}, {transform_indices = @transform_3, window_bounds = array<i64: 1, 8, 512>}]} {
    %c0 = arith.constant 0 : index
    %c0_0 = arith.constant 0 : index
    %c0_1 = arith.constant 0 : index
    %0 = vector.load %arg2[%c0, %c0_0, %c0_1] : memref<1x8x512xf32, #tpu.memory_space<vmem>>, vector<1x8x512xf32>
    %1 = vector.shape_cast %0 : vector<1x8x512xf32> to vector<8x512xf32>
    %c0_2 = arith.constant 0 : index
    %c0_3 = arith.constant 0 : index
    %c0_4 = arith.constant 0 : index
    %2 = vector.load %arg3[%c0_2, %c0_3, %c0_4] : memref<1x8x1xf32, #tpu.memory_space<vmem>>, vector<1x8x1xf32>
    %3 = vector.shape_cast %2 : vector<1x8x1xf32> to vector<8x1xf32>
    %4 = vector.broadcast %3 : vector<8x1xf32> to vector<8x512xf32>
    %5 = arith.mulf %1, %4 : vector<8x512xf32>
    %c0_5 = arith.constant 0 : index
    %c0_6 = arith.constant 0 : index
    %c0_7 = arith.constant 0 : index
    %6 = vector.load %arg4[%c0_5, %c0_6, %c0_7] : memref<1x8x1xf32, #tpu.memory_space<vmem>>, vector<1x8x1xf32>
    %7 = vector.shape_cast %6 : vector<1x8x1xf32> to vector<8x1xf32>
    %8 = vector.broadcast %7 : vector<8x1xf32> to vector<8x512xf32>
    %9 = arith.addf %5, %8 : vector<8x512xf32>
    %cst = arith.constant 2.000000e-01 : f32
    %10 = vector.broadcast %cst : f32 to vector<8x512xf32>
    %11 = arith.mulf %10, %9 : vector<8x512xf32>
    %12 = arith.maximumf %9, %11 : vector<8x512xf32>
    %c0_8 = arith.constant 0 : index
    %c0_9 = arith.constant 0 : index
    %c0_10 = arith.constant 0 : index
    %13 = vector.load %arg5[%c0_8, %c0_9, %c0_10] : memref<1x8x512xf32, #tpu.memory_space<vmem>>, vector<1x8x512xf32>
    %14 = vector.shape_cast %13 : vector<1x8x512xf32> to vector<8x512xf32>
    %15 = vector.shape_cast %12 : vector<8x512xf32> to vector<1x8x512xf32>
    tpu.vector_store %arg5[%c0_8, %c0_9, %c0_10], %15 {strides = array<i32>} : memref<1x8x512xf32, #tpu.memory_space<vmem>>, vector<1x8x512xf32>,
    return
  }
  func.func @transform_0(%arg0: i32, %arg1: i32) -> (i32, i32, i32) {
    %c0_i32 = arith.constant 0 : i32
    %c0_i32_0 = arith.constant 0 : i32
    return %arg0, %c0_i32, %arg1 : i32, i32, i32
  }
  func.func @transform_1(%arg0: i32, %arg1: i32) -> (i32, i32, i32) {
    %c0_i32 = arith.constant 0 : i32
    %c0_i32_0 = arith.constant 0 : i32
    %c0_i32_1 = arith.constant 0 : i32
    return %arg0, %c0_i32, %c0_i32_0 : i32, i32, i32
  }
  func.func @transform_2(%arg0: i32, %arg1: i32) -> (i32, i32, i32) {
    %c0_i32 = arith.constant 0 : i32
    %c0_i32_0 = arith.constant 0 : i32
    %c0_i32_1 = arith.constant 0 : i32
    return %arg0, %c0_i32, %c0_i32_0 : i32, i32, i32
  }
  func.func @transform_3(%arg0: i32, %arg1: i32) -> (i32, i32, i32) {
    %c0_i32 = arith.constant 0 : i32
    %c0_i32_0 = arith.constant 0 : i32
    return %arg0, %c0_i32, %arg1 : i32, i32, i32
  }
}

</mosaic_0001>

<llo_original>
// kernel: encoder_block_forward.2
$region0: #{encoder_block_forward.2}
  #allocation0 [shape = 'u32[]', space=smem, size = 0x4, offset = 0x4, fixed_abs, tag = 'smem constant byte address 0x4 - core index']
  #allocation1 [shape = 'u32[144,128]{1,0:T(1,128)}', space=vmem, size = 0x12000, scoped, tag = 'internal scratch']
  %s0 = inlined_call_operand.vmem [shape: bf16[2,256,512], index: 0, kind: input, shape index: {}]
  %s1 = inlined_call_operand.vmem [shape: bf16[8,256], index: 1, kind: input, shape index: {}]
  %s2 = inlined_call_operand.vmem [shape: f32[8,1], index: 2, kind: input, shape index: {}]
  %s3 = inlined_call_operand.vmem [shape: f32[2,8,512], index: 3, kind: output, shape index: {0}]
  %s4 = inlined_call_operand.vmem [shape: f32[2,8,1], index: 4, kind: output, shape index: {1}]
  %s5 = inlined_call_operand.vmem [shape: f32[2,8,1], index: 5, kind: output, shape index: {2}]
  %6 = xla_tuple %s3, %s4, %s5
  %s7 = sld [smem:[#allocation0]]
  $region65: #{encoder_block_forward.2} parent=0
    _
  %s9 = ssub.s32 1, %s7
  %s10 = scalar_select 0, %s9, %s7
  loop: start=0, step=1, limit=4
  $region2: #{encoder_block_forward.2} parent=0 // loop_pre_header
    _
  $region3: #{encoder_block_forward.2} parent=0 // loop_header
    %s12 = sphi 0, %s16
    %p13 = scmp.ge.s32.totalorder %s12, 4
    %s19 = sphi 0, %s31
    %s20 = sphi 0, %s27
    %s21 = sphi 0, %s19
    %s22 = sphi 0, %s20
    %s23 = sphi 0, %s21
    %s24 = sphi 0, %s22
    %s36 = sphi 0, %s38
    %s39 = sphi 0, %s36
    %s40 = sphi 0, %s39
    %s56 = sphi 0, %s40
    %s60 = sphi 0, %s60
    %s62 = sphi 0, %s60
    %s63 = sphi 0, %s62
    %s77 = sphi 0, %s63
    %s81 = sphi 0, %s81
    %s83 = sphi 0, %s81
    %s84 = sphi 0, %s83
    %s98 = sphi 0, %s84
    %s106 = sphi 0, %s108
    %s109 = sphi 0, %s106
    %s110 = sphi 0, %s109
    %s126 = sphi 0, %s110
    %s132 = sphi 0, %s134
    %s135 = sphi 0, %s132
    %s136 = sphi 0, %s135
    %s152 = sphi 0, %s136
    %s158 = sphi 0, %s160
    %s161 = sphi 0, %s158
    %s162 = sphi 0, %s161
    %s178 = sphi 0, %s162
  $region4: #{encoder_block_forward.2} parent=0 // loop_header_branch
    %15 = sbr.rel (%p13) target = $region8
  $region5: #{encoder_block_forward.2} parent=0 // loop_body
    %s17 = ssub.s32 %s12, 1
    %s18 = ssub.s32 %s12, 2
    %s25 = sadd.s32 1, %s20
    %p26 = scmp.ge.s32.totalorder %s25, 1
    %s27 = scalar_select %p26, 0, %s25
    %s28 = sadd.s32 1, %s19
    %s29 = scalar_select %p26, %s28, %s19
    %p30 = scmp.ge.s32.totalorder %s29, 2
    %s31 = scalar_select %p30, 0, %s29
    %s32 = ssub.s32 %s19, %s31
    %s33 = ssub.s32 %s20, %s27
    %s34 = sor.u32 %s32, %s33
    %p35 = scmp.eq.s32.totalorder %s34, 0
    %s37 = sadd.s32 %s36, 1
    %s38 = scalar_select %p35, %s36, %s37
    %p41 = pneg %p35
    %p42 = scmp.eq.s32.totalorder %s12, 1
    %p43 = por %p41, %p42
    %p44 = scmp.ne.s32.totalorder %s36, %s39
    %p45 = scmp.eq.s32.totalorder %s12, 0
    %p46 = por %p44, %p45
    %p47 = scmp.ne.s32.totalorder %s36, %s39
    %p48 = scmp.eq.s32.totalorder %s17, 1
    %p49 = por %p47, %p48
    %p50 = scmp.ne.s32.totalorder %s39, %s40
    %p51 = scmp.eq.s32.totalorder %s17, 0
    %p52 = por %p50, %p51
    %p53 = scmp.ne.s32.totalorder %s39, %s40
    %p54 = scmp.eq.s32.totalorder %s18, 1
    %p55 = por %p53, %p54
    %p57 = scmp.ne.s32.totalorder %s40, %s56
    %p58 = scmp.eq.s32.totalorder %s18, 0
    %p59 = por %p57, %p58
    %s61 = sadd.s32 %s60, 1
    %p64 = scmp.eq.s32.totalorder %s12, 1
    %p65 = scmp.ne.s32.totalorder %s60, %s62
    %p66 = scmp.eq.s32.totalorder %s12, 0
    %p67 = por %p65, %p66
    %p68 = scmp.ne.s32.totalorder %s60, %s62
    %p69 = scmp.eq.s32.totalorder %s17, 1
    %p70 = por %p68, %p69
    %p71 = scmp.ne.s32.totalorder %s62, %s63
    %p72 = scmp.eq.s32.totalorder %s17, 0
    %p73 = por %p71, %p72
    %p74 = scmp.ne.s32.totalorder %s62, %s63
    %p75 = scmp.eq.s32.totalorder %s18, 1
    %p76 = por %p74, %p75
    %p78 = scmp.ne.s32.totalorder %s63, %s77
    %p79 = scmp.eq.s32.totalorder %s18, 0
    %p80 = por %p78, %p79
    %s82 = sadd.s32 %s81, 1
    %p85 = scmp.eq.s32.totalorder %s12, 1
    %p86 = scmp.ne.s32.totalorder %s81, %s83
    %p87 = scmp.eq.s32.totalorder %s12, 0
    %p88 = por %p86, %p87
    %p89 = scmp.ne.s32.totalorder %s81, %s83
    %p90 = scmp.eq.s32.totalorder %s17, 1
    %p91 = por %p89, %p90
    %p92 = scmp.ne.s32.totalorder %s83, %s84
    %p93 = scmp.eq.s32.totalorder %s17, 0
    %p94 = por %p92, %p93
    %p95 = scmp.ne.s32.totalorder %s83, %s84
    %p96 = scmp.eq.s32.totalorder %s18, 1
    %p97 = por %p95, %p96
    %p99 = scmp.ne.s32.totalorder %s84, %s98
    %p100 = scmp.eq.s32.totalorder %s18, 0
    %p101 = por %p99, %p100
    %s102 = ssub.s32 %s19, %s31
    %s103 = ssub.s32 %s20, %s27
    %s104 = sor.u32 %s102, %s103
    %p105 = scmp.eq.s32.totalorder %s104, 0
    %s107 = sadd.s32 %s106, 1
    %s108 = scalar_select %p105, %s106, %s107
    %p111 = pneg %p105
    %p112 = scmp.eq.s32.totalorder %s12, 1
    %p113 = por %p111, %p112
    %p114 = scmp.ne.s32.totalorder %s106, %s109
    %p115 = scmp.eq.s32.totalorder %s12, 0
    %p116 = por %p114, %p115
    %p117 = scmp.ne.s32.totalorder %s106, %s109
    %p118 = scmp.eq.s32.totalorder %s17, 1
    %p119 = por %p117, %p118
    %p120 = scmp.ne.s32.totalorder %s109, %s110
    %p121 = scmp.eq.s32.totalorder %s17, 0
    %p122 = por %p120, %p121
    %p123 = scmp.ne.s32.totalorder %s109, %s110
    %p124 = scmp.eq.s32.totalorder %s18, 1
    %p125 = por %p123, %p124
    %p127 = scmp.ne.s32.totalorder %s110, %s126
    %p128 = scmp.eq.s32.totalorder %s18, 0
    %p129 = por %p127, %p128
    %s130 = ssub.s32 %s19, %s31
    %p131 = scmp.eq.s32.totalorder %s130, 0
    %s133 = sadd.s32 %s132, 1
    %s134 = scalar_select %p131, %s132, %s133
    %p137 = pneg %p131
    %p138 = scmp.eq.s32.totalorder %s12, 1
    %p139 = por %p137, %p138
    %p140 = scmp.ne.s32.totalorder %s132, %s135
    %p141 = scmp.eq.s32.totalorder %s12, 0
    %p142 = por %p140, %p141
    %p143 = scmp.ne.s32.totalorder %s132, %s135
    %p144 = scmp.eq.s32.totalorder %s17, 1
    %p145 = por %p143, %p144
    %p146 = scmp.ne.s32.totalorder %s135, %s136
    %p147 = scmp.eq.s32.totalorder %s17, 0
    %p148 = por %p146, %p147
    %p149 = scmp.ne.s32.totalorder %s135, %s136
    %p150 = scmp.eq.s32.totalorder %s18, 1
    %p151 = por %p149, %p150
    %p153 = scmp.ne.s32.totalorder %s136, %s152
    %p154 = scmp.eq.s32.totalorder %s18, 0
    %p155 = por %p153, %p154
    %s156 = ssub.s32 %s19, %s31
    %p157 = scmp.eq.s32.totalorder %s156, 0
    %s159 = sadd.s32 %s158, 1
    %s160 = scalar_select %p157, %s158, %s159
    %p163 = pneg %p157
    %p164 = scmp.eq.s32.totalorder %s12, 1
    %p165 = por %p163, %p164
    %p166 = scmp.ne.s32.totalorder %s158, %s161
    %p167 = scmp.eq.s32.totalorder %s12, 0
    %p168 = por %p166, %p167
    %p169 = scmp.ne.s32.totalorder %s158, %s161
    %p170 = scmp.eq.s32.totalorder %s17, 1
    %p171 = por %p169, %p170
    %p172 = scmp.ne.s32.totalorder %s161, %s162
    %p173 = scmp.eq.s32.totalorder %s17, 0
    %p174 = por %p172, %p173
    %p175 = scmp.ne.s32.totalorder %s161, %s162
    %p176 = scmp.eq.s32.totalorder %s18, 1
    %p177 = por %p175, %p176
    %p179 = scmp.ne.s32.totalorder %s162, %s178
    %p180 = scmp.eq.s32.totalorder %s18, 0
    %p181 = por %p179, %p180
    %p182 = scmp.le.s32.totalorder 1, %s12
    %p183 = scmp.lt.s32.totalorder %s12, 3
    %p184 = pnand %p182, %p183
    %p185 = pneg %p184
    // Predicated region
    $region9: #{encoder_block_forward.2} parent=5 // pred_check
      _
    $region10: #{encoder_block_forward.2} parent=5 // pred_check_branch
      %187 = sbr.rel (%p184) target = $region12
    $region11: #{encoder_block_forward.2} parent=5 // pred_region
      %s188 = ssub.s32 %s12, 1
      // Predicated region
      $region13: #{encoder_block_forward.2} parent=11 // pred_check
        %p189 = pneg %p73
      $region14: #{encoder_block_forward.2} parent=11 // pred_check_branch
        %191 = sbr.rel (%p189) target = $region16
      $region15: #{encoder_block_forward.2} parent=11 // pred_region
        _
      $region16: #{encoder_block_forward.2} parent=11 // pred_fallthru
        _
      // Predicated region
      $region17: #{encoder_block_forward.2} parent=11 // pred_check
        %p192 = pneg %p94
      $region18: #{encoder_block_forward.2} parent=11 // pred_check_branch
        %194 = sbr.rel (%p192) target = $region20
      $region19: #{encoder_block_forward.2} parent=11 // pred_region
        _
      $region20: #{encoder_block_forward.2} parent=11 // pred_fallthru
        _
    $region12: #{encoder_block_forward.2} parent=5 // pred_fallthru
      _
    %p195 = scmp.lt.s32.totalorder %s12, 2
    // Predicated region
    $region21: #{encoder_block_forward.2} parent=5 // pred_check
      %p196 = pneg %p195
    $region22: #{encoder_block_forward.2} parent=5 // pred_check_branch
      %198 = sbr.rel (%p196) target = $region24
    $region23: #{encoder_block_forward.2} parent=5 // pred_region
      // Predicated region
      $region25: #{encoder_block_forward.2} parent=23 // pred_check
        %p199 = pneg %p46
      $region26: #{encoder_block_forward.2} parent=23 // pred_check_branch
        %201 = sbr.rel (%p199) target = $region28
      $region27: #{encoder_block_forward.2} parent=23 // pred_region
        %s202 = smul.u32 4, %s20
        %p203 = scmp.lt.s32.totalorder %s19, 1
        %s204 = scalar_select %p203, %s19, 1
        %p205 = scmp.lt.s32.totalorder %s202, 3
        %s206 = scalar_select %p205, %s202, 3
        %s207 = smul.addr %s204, 128
        %s208 = sadd.s32 %s206, %s207
        %s209 = smul.addr %s208, 4
        %s210 = scalar_lea.vmem %s0, %s209
        %s211 = smul.u32 4, %s20
      $region28: #{encoder_block_forward.2} parent=23 // pred_fallthru
        _
    $region24: #{encoder_block_forward.2} parent=5 // pred_fallthru
      _
    %p212 = scmp.le.s32.totalorder 1, %s12
    %p213 = scmp.lt.s32.totalorder %s12, 3
    %p214 = pnand %p212, %p213
    %p215 = pneg %p214
    // Predicated region
    $region29: #{encoder_block_forward.2} parent=5 // pred_check
      _
    $region30: #{encoder_block_forward.2} parent=5 // pred_check_branch
      %217 = sbr.rel (%p214) target = $region32
    $region31: #{encoder_block_forward.2} parent=5 // pred_region
      %s218 = ssub.s32 %s12, 1
      %s219 = smul.u32 4, %s22
      %p220 = scmp.lt.s32.totalorder %s21, 1
      %s221 = scalar_select %p220, %s21, 1
      %p222 = scmp.lt.s32.totalorder %s219, 3
      %s223 = scalar_select %p222, %s219, 3
      %s224 = smul.addr %s221, 128
      %s225 = sadd.s32 %s223, %s224
      %s226 = smul.addr %s225, 4
      %s227 = scalar_lea.vmem %s0, %s226
      %p228 = pneg %p52
      %p229 = pneg %p49
      %p230 = pneg %p73
      %p231 = pneg %p70
      %p232 = pneg %p94
      %p233 = pneg %p91
      %p234 = pneg %p122
      %p235 = pneg %p119
      %s236 = smul.u32 4, %s22
      %p237 = scmp.lt.s32.totalorder %s21, 1
      %s238 = scalar_select %p237, %s21, 1
      %p239 = scmp.lt.s32.totalorder %s236, 3
      %s240 = scalar_select %p239, %s236, 3
      %s241 = smul.addr %s238, 4
      %s242 = sadd.s32 %s240, %s241
      %s243 = smul.addr %s242, 8
      %s244 = scalar_lea.vmem %s3, %s243
      %p245 = pneg %p148
      %p246 = pneg %p145
      %p247 = scmp.lt.s32.totalorder %s21, 1
      %s248 = scalar_select %p247, %s21, 1
      %s249 = smul.addr %s248, 8
      %s250 = scalar_lea.vmem %s4, %s249
      %p251 = pneg %p174
      %p252 = pneg %p171
      %p253 = scmp.lt.s32.totalorder %s21, 1
      %s254 = scalar_select %p253, %s21, 1
      %s255 = smul.addr %s254, 8
      %s256 = scalar_lea.vmem %s5, %s255
      %s257 = smul.u32 4, %s22
      %p258 = scmp.lt.s32.totalorder %s21, 1
      %s259 = scalar_select %p258, %s21, 1
      %p260 = scmp.lt.s32.totalorder %s257, 3
      %s261 = scalar_select %p260, %s257, 3
      %s262 = smul.addr %s259, 128
      %s263 = sadd.s32 %s261, %s262
      %s264 = smul.addr %s263, 4
      %s265 = scalar_lea.vmem %s0, %s264
      %s266 = smul.u32 4, %s22
      %s267 = smul.u32 4, %s22
      %p268 = scmp.lt.s32.totalorder %s21, 1
      %s269 = scalar_select %p268, %s21, 1
      %p270 = scmp.lt.s32.totalorder %s267, 3
      %s271 = scalar_select %p270, %s267, 3
      %s272 = smul.addr %s269, 4
      %s273 = sadd.s32 %s271, %s272
      %s274 = smul.addr %s273, 8
      %s275 = scalar_lea.vmem %s3, %s274
      %s276 = smul.u32 4, %s22
      %p277 = scmp.lt.s32.totalorder %s21, 1
      %s278 = scalar_select %p277, %s21, 1
      %s279 = smul.addr %s278, 8
      %s280 = scalar_lea.vmem %s4, %s279
      %p281 = scmp.lt.s32.totalorder %s21, 1
      %s282 = scalar_select %p281, %s21, 1
      %s283 = smul.addr %s282, 8
      %s284 = scalar_lea.vmem %s5, %s283
      %p285 = scmp.eq.s32.totalorder %s22, 0
      // Predicated region
      $region33: #{encoder_block_forward.2} parent=31 // pred_check
        %p286 = pneg %p285
      $region34: #{encoder_block_forward.2} parent=31 // pred_check_branch
        %288 = sbr.rel (%p286) target = $region36
      $region35: #{encoder_block_forward.2} parent=31 // pred_region
        %vm289 = vcmask 7168
        %290 = vst.msk [vmem:[%s280] sm:$0xff] %vm289, 0.0
        %291 = vst.msk [vmem:[%s284] sm:$0xff] %vm289, 0.0
      $region36: #{encoder_block_forward.2} parent=31 // pred_fallthru
        _
      %v292 = vld [vmem:[%s1] sm:$0xff]
      %v293 = vld [vmem:[%s265] sm:$0xff]
      %v294 = vld [vmem:[%s265 + $0x8] sm:$0xff]
      %v295 = vld [vmem:[%s265 + $0x10] sm:$0xff]
      %v296 = vld [vmem:[%s265 + $0x18] sm:$0xff]
      %v297 = vld [vmem:[%s265 + $0x20] sm:$0xff]
      %v298 = vld [vmem:[%s265 + $0x28] sm:$0xff]
      %v299 = vld [vmem:[%s265 + $0x30] sm:$0xff]
      %v300 = vld [vmem:[%s265 + $0x38] sm:$0xff]
      %v301 = vld [vmem:[%s265 + $0x40] sm:$0xff]
      %v302 = vld [vmem:[%s265 + $0x48] sm:$0xff]
      %v303 = vld [vmem:[%s265 + $0x50] sm:$0xff]
      %v304 = vld [vmem:[%s265 + $0x58] sm:$0xff]
      %v305 = vld [vmem:[%s265 + $0x60] sm:$0xff]
      %v306 = vld [vmem:[%s265 + $0x68] sm:$0xff]
      %v307 = vld [vmem:[%s265 + $0x70] sm:$0xff]
      %v308 = vld [vmem:[%s265 + $0x78] sm:$0xff]
      %v309 = vld [vmem:[%s265 + $0x80] sm:$0xff]
      %v310 = vld [vmem:[%s265 + $0x88] sm:$0xff]
      %v311 = vld [vmem:[%s265 + $0x90] sm:$0xff]
      %v312 = vld [vmem:[%s265 + $0x98] sm:$0xff]
      %v313 = vld [vmem:[%s265 + $0xa0] sm:$0xff]
      %v314 = vld [vmem:[%s265 + $0xa8] sm:$0xff]
      %v315 = vld [vmem:[%s265 + $0xb0] sm:$0xff]
      %v316 = vld [vmem:[%s265 + $0xb8] sm:$0xff]
      %v317 = vld [vmem:[%s265 + $0xc0] sm:$0xff]
      %v318 = vld [vmem:[%s265 + $0xc8] sm:$0xff]
      %v319 = vld [vmem:[%s265 + $0xd0] sm:$0xff]
      %v320 = vld [vmem:[%s265 + $0xd8] sm:$0xff]
      %v321 = vld [vmem:[%s265 + $0xe0] sm:$0xff]
      %v322 = vld [vmem:[%s265 + $0xe8] sm:$0xff]
      %v323 = vld [vmem:[%s265 + $0xf0] sm:$0xff]
      %v324 = vld [vmem:[%s265 + $0xf8] sm:$0xff]
      %v325 = vld [vmem:[%s265 + $0x100] sm:$0xff]
      %v326 = vld [vmem:[%s265 + $0x108] sm:$0xff]
      %v327 = vld [vmem:[%s265 + $0x110] sm:$0xff]
      %v328 = vld [vmem:[%s265 + $0x118] sm:$0xff]
      %v329 = vld [vmem:[%s265 + $0x120] sm:$0xff]
      %v330 = vld [vmem:[%s265 + $0x128] sm:$0xff]
      %v331 = vld [vmem:[%s265 + $0x130] sm:$0xff]
      %v332 = vld [vmem:[%s265 + $0x138] sm:$0xff]
      %v333 = vld [vmem:[%s265 + $0x140] sm:$0xff]
      %v334 = vld [vmem:[%s265 + $0x148] sm:$0xff]
      %v335 = vld [vmem:[%s265 + $0x150] sm:$0xff]
      %v336 = vld [vmem:[%s265 + $0x158] sm:$0xff]
      %v337 = vld [vmem:[%s265 + $0x160] sm:$0xff]
      %v338 = vld [vmem:[%s265 + $0x168] sm:$0xff]
      %v339 = vld [vmem:[%s265 + $0x170] sm:$0xff]
      %v340 = vld [vmem:[%s265 + $0x178] sm:$0xff]
      %v341 = vld [vmem:[%s265 + $0x180] sm:$0xff]
      %v342 = vld [vmem:[%s265 + $0x188] sm:$0xff]
      %v343 = vld [vmem:[%s265 + $0x190] sm:$0xff]
      %v344 = vld [vmem:[%s265 + $0x198] sm:$0xff]
      %v345 = vld [vmem:[%s265 + $0x1a0] sm:$0xff]
      %v346 = vld [vmem:[%s265 + $0x1a8] sm:$0xff]
      %v347 = vld [vmem:[%s265 + $0x1b0] sm:$0xff]
      %v348 = vld [vmem:[%s265 + $0x1b8] sm:$0xff]
      %v349 = vld [vmem:[%s265 + $0x1c0] sm:$0xff]
      %v350 = vld [vmem:[%s265 + $0x1c8] sm:$0xff]
      %v351 = vld [vmem:[%s265 + $0x1d0] sm:$0xff]
      %v352 = vld [vmem:[%s265 + $0x1d8] sm:$0xff]
      %v353 = vld [vmem:[%s265 + $0x1e0] sm:$0xff]
      %v354 = vld [vmem:[%s265 + $0x1e8] sm:$0xff]
      %v355 = vld [vmem:[%s265 + $0x1f0] sm:$0xff]
      %v356 = vld [vmem:[%s265 + $0x1f8] sm:$0xff]
      %v357 = vld [vmem:[%s2] sm:$0xff]
      %359 = vset.pattern.permute.xlu0 0
      %360 = vperm.xlu0 %359, %v357
      %v361 = vpop.permute.xlu0 %360
      %v364 = vunpack.c.l.b16 %v292
      %v365 = vunpack.c.h.b16 %v292
      %v366 = vpack.c.b16 %v364, %v364
      %v367 = vpack.c.b16 %v365, %v365
      %v434 = vunpack.c.l.b16 %v293
      %v435 = vunpack.c.h.b16 %v293
      %v436 = vunpack.c.l.b16 %v294
      %v437 = vunpack.c.h.b16 %v294
      %v438 = vunpack.c.l.b16 %v295
      %v439 = vunpack.c.h.b16 %v295
      %v440 = vunpack.c.l.b16 %v296
      %v441 = vunpack.c.h.b16 %v296
      %v442 = vunpack.c.l.b16 %v297
      %v443 = vunpack.c.h.b16 %v297
      %v444 = vunpack.c.l.b16 %v298
      %v445 = vunpack.c.h.b16 %v298
      %v446 = vunpack.c.l.b16 %v299
      %v447 = vunpack.c.h.b16 %v299
      %v448 = vunpack.c.l.b16 %v300
      %v449 = vunpack.c.h.b16 %v300
      %v450 = vunpack.c.l.b16 %v301
      %v451 = vunpack.c.h.b16 %v301
      %v452 = vunpack.c.l.b16 %v302
      %v453 = vunpack.c.h.b16 %v302
      %v454 = vunpack.c.l.b16 %v303
      %v455 = vunpack.c.h.b16 %v303
      %v456 = vunpack.c.l.b16 %v304
      %v457 = vunpack.c.h.b16 %v304
      %v458 = vunpack.c.l.b16 %v305
      %v459 = vunpack.c.h.b16 %v305
      %v460 = vunpack.c.l.b16 %v306
      %v461 = vunpack.c.h.b16 %v306
      %v462 = vunpack.c.l.b16 %v307
      %v463 = vunpack.c.h.b16 %v307
      %v464 = vunpack.c.l.b16 %v308
      %v465 = vunpack.c.h.b16 %v308
      %v466 = vunpack.c.l.b16 %v309
      %v467 = vunpack.c.h.b16 %v309
      %v468 = vunpack.c.l.b16 %v310
      %v469 = vunpack.c.h.b16 %v310
      %v470 = vunpack.c.l.b16 %v311
      %v471 = vunpack.c.h.b16 %v311
      %v472 = vunpack.c.l.b16 %v312
      %v473 = vunpack.c.h.b16 %v312
      %v474 = vunpack.c.l.b16 %v313
      %v475 = vunpack.c.h.b16 %v313
      %v476 = vunpack.c.l.b16 %v314
      %v477 = vunpack.c.h.b16 %v314
      %v478 = vunpack.c.l.b16 %v315
      %v479 = vunpack.c.h.b16 %v315
      %v480 = vunpack.c.l.b16 %v316
      %v481 = vunpack.c.h.b16 %v316
      %v482 = vunpack.c.l.b16 %v317
      %v483 = vunpack.c.h.b16 %v317
      %v484 = vunpack.c.l.b16 %v318
      %v485 = vunpack.c.h.b16 %v318
      %v486 = vunpack.c.l.b16 %v319
      %v487 = vunpack.c.h.b16 %v319
      %v488 = vunpack.c.l.b16 %v320
      %v489 = vunpack.c.h.b16 %v320
      %v490 = vunpack.c.l.b16 %v321
      %v491 = vunpack.c.h.b16 %v321
      %v492 = vunpack.c.l.b16 %v322
      %v493 = vunpack.c.h.b16 %v322
      %v494 = vunpack.c.l.b16 %v323
      %v495 = vunpack.c.h.b16 %v323
      %v496 = vunpack.c.l.b16 %v324
      %v497 = vunpack.c.h.b16 %v324
      %v498 = vunpack.c.l.b16 %v325
      %v499 = vunpack.c.h.b16 %v325
      %v500 = vunpack.c.l.b16 %v326
      %v501 = vunpack.c.h.b16 %v326
      %v502 = vunpack.c.l.b16 %v327
      %v503 = vunpack.c.h.b16 %v327
      %v504 = vunpack.c.l.b16 %v328
      %v505 = vunpack.c.h.b16 %v328
      %v506 = vunpack.c.l.b16 %v329
      %v507 = vunpack.c.h.b16 %v329
      %v508 = vunpack.c.l.b16 %v330
      %v509 = vunpack.c.h.b16 %v330
      %v510 = vunpack.c.l.b16 %v331
      %v511 = vunpack.c.h.b16 %v331
      %v512 = vunpack.c.l.b16 %v332
      %v513 = vunpack.c.h.b16 %v332
      %v514 = vunpack.c.l.b16 %v333
      %v515 = vunpack.c.h.b16 %v333
      %v516 = vunpack.c.l.b16 %v334
      %v517 = vunpack.c.h.b16 %v334
      %v518 = vunpack.c.l.b16 %v335
      %v519 = vunpack.c.h.b16 %v335
      %v520 = vunpack.c.l.b16 %v336
      %v521 = vunpack.c.h.b16 %v336
      %v522 = vunpack.c.l.b16 %v337
      %v523 = vunpack.c.h.b16 %v337
      %v524 = vunpack.c.l.b16 %v338
      %v525 = vunpack.c.h.b16 %v338
      %v526 = vunpack.c.l.b16 %v339
      %v527 = vunpack.c.h.b16 %v339
      %v528 = vunpack.c.l.b16 %v340
      %v529 = vunpack.c.h.b16 %v340
      %v530 = vunpack.c.l.b16 %v341
      %v531 = vunpack.c.h.b16 %v341
      %v532 = vunpack.c.l.b16 %v342
      %v533 = vunpack.c.h.b16 %v342
      %v534 = vunpack.c.l.b16 %v343
      %v535 = vunpack.c.h.b16 %v343
      %v536 = vunpack.c.l.b16 %v344
      %v537 = vunpack.c.h.b16 %v344
      %v538 = vunpack.c.l.b16 %v345
      %v539 = vunpack.c.h.b16 %v345
      %v540 = vunpack.c.l.b16 %v346
      %v541 = vunpack.c.h.b16 %v346
      %v542 = vunpack.c.l.b16 %v347
      %v543 = vunpack.c.h.b16 %v347
      %v544 = vunpack.c.l.b16 %v348
      %v545 = vunpack.c.h.b16 %v348
      %v546 = vunpack.c.l.b16 %v349
      %v547 = vunpack.c.h.b16 %v349
      %v548 = vunpack.c.l.b16 %v350
      %v549 = vunpack.c.h.b16 %v350
      %v550 = vunpack.c.l.b16 %v351
      %v551 = vunpack.c.h.b16 %v351
      %v552 = vunpack.c.l.b16 %v352
      %v553 = vunpack.c.h.b16 %v352
      %v554 = vunpack.c.l.b16 %v353
      %v555 = vunpack.c.h.b16 %v353
      %v556 = vunpack.c.l.b16 %v354
      %v557 = vunpack.c.h.b16 %v354
      %v558 = vunpack.c.l.b16 %v355
      %v559 = vunpack.c.h.b16 %v355
      %v560 = vunpack.c.l.b16 %v356
      %v561 = vunpack.c.h.b16 %v356
      %v562 = vpack.c.b16 %v438, %v434
      %v563 = vpack.c.b16 %v439, %v435
      %v564 = vpack.c.b16 %v440, %v436
      %v565 = vpack.c.b16 %v441, %v437
      %v566 = vpack.c.b16 %v446, %v442
      %v567 = vpack.c.b16 %v447, %v443
      %v568 = vpack.c.b16 %v448, %v444
      %v569 = vpack.c.b16 %v449, %v445
      %v570 = vpack.c.b16 %v454, %v450
      %v571 = vpack.c.b16 %v455, %v451
      %v572 = vpack.c.b16 %v456, %v452
      %v573 = vpack.c.b16 %v457, %v453
      %v574 = vpack.c.b16 %v462, %v458
      %v575 = vpack.c.b16 %v463, %v459
      %v576 = vpack.c.b16 %v464, %v460
      %v577 = vpack.c.b16 %v465, %v461
      %v578 = vpack.c.b16 %v470, %v466
      %v579 = vpack.c.b16 %v471, %v467
      %v580 = vpack.c.b16 %v472, %v468
      %v581 = vpack.c.b16 %v473, %v469
      %v582 = vpack.c.b16 %v478, %v474
      %v583 = vpack.c.b16 %v479, %v475
      %v584 = vpack.c.b16 %v480, %v476
      %v585 = vpack.c.b16 %v481, %v477
      %v586 = vpack.c.b16 %v486, %v482
      %v587 = vpack.c.b16 %v487, %v483
      %v588 = vpack.c.b16 %v488, %v484
      %v589 = vpack.c.b16 %v489, %v485
      %v590 = vpack.c.b16 %v494, %v490
      %v591 = vpack.c.b16 %v495, %v491
      %v592 = vpack.c.b16 %v496, %v492
      %v593 = vpack.c.b16 %v497, %v493
      %v594 = vpack.c.b16 %v502, %v498
      %v595 = vpack.c.b16 %v503, %v499
      %v596 = vpack.c.b16 %v504, %v500
      %v597 = vpack.c.b16 %v505, %v501
      %v598 = vpack.c.b16 %v510, %v506
      %v599 = vpack.c.b16 %v511, %v507
      %v600 = vpack.c.b16 %v512, %v508
      %v601 = vpack.c.b16 %v513, %v509
      %v602 = vpack.c.b16 %v518, %v514
      %v603 = vpack.c.b16 %v519, %v515
      %v604 = vpack.c.b16 %v520, %v516
      %v605 = vpack.c.b16 %v521, %v517
      %v606 = vpack.c.b16 %v526, %v522
      %v607 = vpack.c.b16 %v527, %v523
      %v608 = vpack.c.b16 %v528, %v524
      %v609 = vpack.c.b16 %v529, %v525
      %v610 = vpack.c.b16 %v534, %v530
      %v611 = vpack.c.b16 %v535, %v531
      %v612 = vpack.c.b16 %v536, %v532
      %v613 = vpack.c.b16 %v537, %v533
      %v614 = vpack.c.b16 %v542, %v538
      %v615 = vpack.c.b16 %v543, %v539
      %v616 = vpack.c.b16 %v544, %v540
      %v617 = vpack.c.b16 %v545, %v541
      %v618 = vpack.c.b16 %v550, %v546
      %v619 = vpack.c.b16 %v551, %v547
      %v620 = vpack.c.b16 %v552, %v548
      %v621 = vpack.c.b16 %v553, %v549
      %v622 = vpack.c.b16 %v558, %v554
      %v623 = vpack.c.b16 %v559, %v555
      %v624 = vpack.c.b16 %v560, %v556
      %v625 = vpack.c.b16 %v561, %v557
      %690 = vmatprep.subr.bf16.mxu0 %v563
      %691 = vmatpush1.bf16.msra.mxu0 %v562
      %692 = vmatprep.subr.bf16.mxu0 %v567
      %693 = vmatpush1.bf16.msra.mxu0 %v566
      %694 = vmatprep.subr.bf16.mxu0 %v571
      %695 = vmatpush1.bf16.msra.mxu0 %v570
      %696 = vmatprep.subr.bf16.mxu0 %v575
      %697 = vmatpush1.bf16.msra.mxu0 %v574
      %698 = vmatprep.subr.bf16.mxu0 %v579
      %699 = vmatpush1.bf16.msra.mxu0 %v578
      %700 = vmatprep.subr.bf16.mxu0 %v583
      %701 = vmatpush1.bf16.msra.mxu0 %v582
      %702 = vmatprep.subr.bf16.mxu0 %v587
      %703 = vmatpush1.bf16.msra.mxu0 %v586
      %704 = vmatprep.subr.bf16.mxu0 %v591
      %705 = vmatpush1.bf16.msra.mxu0 %v590
      %706 = vmatprep.subr.bf16.mxu0 %v595
      %707 = vmatpush1.bf16.msra.mxu0 %v594
      %708 = vmatprep.subr.bf16.mxu0 %v599
      %709 = vmatpush1.bf16.msra.mxu0 %v598
      %710 = vmatprep.subr.bf16.mxu0 %v603
      %711 = vmatpush1.bf16.msra.mxu0 %v602
      %712 = vmatprep.subr.bf16.mxu0 %v607
      %713 = vmatpush1.bf16.msra.mxu0 %v606
      %714 = vmatprep.subr.bf16.mxu0 %v611
      %715 = vmatpush1.bf16.msra.mxu0 %v610
      %716 = vmatprep.subr.bf16.mxu0 %v615
      %717 = vmatpush1.bf16.msra.mxu0 %v614
      %718 = vmatprep.subr.bf16.mxu0 %v619
      %719 = vmatpush1.bf16.msra.mxu0 %v618
      %720 = vmatprep.subr.bf16.mxu0 %v623
      %721 = vmatpush1.bf16.msra.mxu0 %v622
      %722 = vmatprep.mubr.bf16.mxu0 %v367
      %723 = vmatmul.mubr.bf16.gmra.mrb[0].mxu0 %v366
      %v724 = vpop.f32.mrb[0].mxu0
      %v725 = vadd.f32 %v361, %v724
      %v726 = vpop.f32.mrb[0].mxu0
      %v727 = vadd.f32 %v361, %v726
      %v728 = vpop.f32.mrb[0].mxu0
      %v729 = vpop.f32.mrb[0].mxu0
      %730 = vdwg.mxu0
      %731 = vmatprep.subr.bf16.mxu0 %v565
      %732 = vmatpush1.bf16.msra.mxu0 %v564
      %733 = vmatprep.subr.bf16.mxu0 %v569
      %734 = vmatpush1.bf16.msra.mxu0 %v568
      %735 = vmatprep.subr.bf16.mxu0 %v573
      %736 = vmatpush1.bf16.msra.mxu0 %v572
      %737 = vmatprep.subr.bf16.mxu0 %v577
      %738 = vmatpush1.bf16.msra.mxu0 %v576
      %739 = vmatprep.subr.bf16.mxu0 %v581
      %740 = vmatpush1.bf16.msra.mxu0 %v580
      %741 = vmatprep.subr.bf16.mxu0 %v585
      %742 = vmatpush1.bf16.msra.mxu0 %v584
      %743 = vmatprep.subr.bf16.mxu0 %v589
      %744 = vmatpush1.bf16.msra.mxu0 %v588
      %745 = vmatprep.subr.bf16.mxu0 %v593
      %746 = vmatpush1.bf16.msra.mxu0 %v592
      %747 = vmatprep.subr.bf16.mxu0 %v597
      %748 = vmatpush1.bf16.msra.mxu0 %v596
      %749 = vmatprep.subr.bf16.mxu0 %v601
      %750 = vmatpush1.bf16.msra.mxu0 %v600
      %751 = vmatprep.subr.bf16.mxu0 %v605
      %752 = vmatpush1.bf16.msra.mxu0 %v604
      %753 = vmatprep.subr.bf16.mxu0 %v609
      %754 = vmatpush1.bf16.msra.mxu0 %v608
      %755 = vmatprep.subr.bf16.mxu0 %v613
      %756 = vmatpush1.bf16.msra.mxu0 %v612
      %757 = vmatprep.subr.bf16.mxu0 %v617
      %758 = vmatpush1.bf16.msra.mxu0 %v616
      %759 = vmatprep.subr.bf16.mxu0 %v621
      %760 = vmatpush1.bf16.msra.mxu0 %v620
      %761 = vmatprep.subr.bf16.mxu0 %v625
      %762 = vmatpush1.bf16.msra.mxu0 %v624
      %763 = vmatprep.mubr.bf16.mxu0 %v367
      %764 = vmatmul.mubr.bf16.gmra.mrb[0].mxu0 %v366
      %v765 = vpop.f32.mrb[0].mxu0
      %v766 = vadd.f32 %v361, %v765
      %v767 = vpop.f32.mrb[0].mxu0
      %v768 = vadd.f32 %v361, %v767
      %v769 = vpop.f32.mrb[0].mxu0
      %v770 = vpop.f32.mrb[0].mxu0
      %771 = vdwg.mxu0
      %772 = vst [vmem:[%s275] sm:$0xff] %v725
      %773 = vst [vmem:[%s275 + $0x8] sm:$0xff] %v727
      %774 = vst [vmem:[%s275 + $0x10] sm:$0xff] %v766
      %775 = vst [vmem:[%s275 + $0x18] sm:$0xff] %v768
      %v776 = vld [vmem:[%s280] sm:$0xff]
      %v777 = vadd.f32 %v725, %v727
      %v778 = vadd.f32 %v777, %v766
      %v779 = vadd.f32 %v778, %v768
      %780 = vadd.xlane.f32.xlu0 %v779
      %v781 = vpop.xlane.xlu0 %780
      %v782 = vadd.f32 %v776, %v781
      %vm783 = vcmask 7168
      %784 = vst.msk [vmem:[%s280] sm:$0xff] %vm783, %v782
      %v785 = vld [vmem:[%s284] sm:$0xff]
      %v786 = vmul.f32 %v725, %v725
      %v787 = vmul.f32 %v727, %v727
      %v788 = vmul.f32 %v766, %v766
      %v789 = vmul.f32 %v768, %v768
      %v790 = vadd.f32 %v786, %v787
      %v791 = vadd.f32 %v790, %v788
      %v792 = vadd.f32 %v791, %v789
      %793 = vadd.xlane.f32.xlu0 %v792
      %v794 = vpop.xlane.xlu0 %793
      %v795 = vadd.f32 %v785, %v794
      %796 = vst.msk [vmem:[%s284] sm:$0xff] %vm783, %v795
      %s797 = smul.u32 4, %s22
      %p798 = scmp.lt.s32.totalorder %s21, 1
      %s799 = scalar_select %p798, %s21, 1
      %p800 = scmp.lt.s32.totalorder %s797, 3
      %s801 = scalar_select %p800, %s797, 3
      %s802 = smul.addr %s799, 4
      %s803 = sadd.s32 %s801, %s802
      %s804 = smul.addr %s803, 8
      %s805 = scalar_lea.vmem %s3, %s804
      %p806 = scmp.lt.s32.totalorder %s21, 1
      %s807 = scalar_select %p806, %s21, 1
      %s808 = smul.addr %s807, 8
      %s809 = scalar_lea.vmem %s4, %s808
      %p810 = scmp.lt.s32.totalorder %s21, 1
      %s811 = scalar_select %p810, %s21, 1
      %s812 = smul.addr %s811, 8
      %s813 = scalar_lea.vmem %s5, %s812
      // Predicated region
      $region37: #{encoder_block_forward.2} parent=31 // pred_check
        %p814 = pneg %p119
      $region38: #{encoder_block_forward.2} parent=31 // pred_check_branch
        %816 = sbr.rel (%p814) target = $region40
      $region39: #{encoder_block_forward.2} parent=31 // pred_region
        %s817 = smul.u32 4, %s22
      $region40: #{encoder_block_forward.2} parent=31 // pred_fallthru
        _
      // Predicated region
      $region41: #{encoder_block_forward.2} parent=31 // pred_check
        %p818 = pneg %p145
      $region42: #{encoder_block_forward.2} parent=31 // pred_check_branch
        %820 = sbr.rel (%p818) target = $region44
      $region43: #{encoder_block_forward.2} parent=31 // pred_region
        _
      $region44: #{encoder_block_forward.2} parent=31 // pred_fallthru
        _
      // Predicated region
      $region45: #{encoder_block_forward.2} parent=31 // pred_check
        %p821 = pneg %p171
      $region46: #{encoder_block_forward.2} parent=31 // pred_check_branch
        %823 = sbr.rel (%p821) target = $region48
      $region47: #{encoder_block_forward.2} parent=31 // pred_region
        _
      $region48: #{encoder_block_forward.2} parent=31 // pred_fallthru
        _
    $region32: #{encoder_block_forward.2} parent=5 // pred_fallthru
      _
    %p824 = scmp.le.s32.totalorder 2, %s12
    // Predicated region
    $region49: #{encoder_block_forward.2} parent=5 // pred_check
      %p825 = pneg %p824
    $region50: #{encoder_block_forward.2} parent=5 // pred_check_branch
      %827 = sbr.rel (%p825) target = $region52
    $region51: #{encoder_block_forward.2} parent=5 // pred_region
      %s828 = ssub.s32 %s12, 2
      // Predicated region
      $region53: #{encoder_block_forward.2} parent=51 // pred_check
        %p829 = pneg %p125
      $region54: #{encoder_block_forward.2} parent=51 // pred_check_branch
        %831 = sbr.rel (%p829) target = $region56
      $region55: #{encoder_block_forward.2} parent=51 // pred_region
        %s832 = smul.u32 4, %s24
        %p833 = scmp.lt.s32.totalorder %s23, 1
        %s834 = scalar_select %p833, %s23, 1
        %p835 = scmp.lt.s32.totalorder %s832, 3
        %s836 = scalar_select %p835, %s832, 3
        %s837 = smul.addr %s834, 4
        %s838 = sadd.s32 %s836, %s837
        %s839 = smul.addr %s838, 8
        %s840 = scalar_lea.vmem %s3, %s839
      $region56: #{encoder_block_forward.2} parent=51 // pred_fallthru
        _
      // Predicated region
      $region57: #{encoder_block_forward.2} parent=51 // pred_check
        %p841 = pneg %p151
      $region58: #{encoder_block_forward.2} parent=51 // pred_check_branch
        %843 = sbr.rel (%p841) target = $region60
      $region59: #{encoder_block_forward.2} parent=51 // pred_region
        %p844 = scmp.lt.s32.totalorder %s23, 1
        %s845 = scalar_select %p844, %s23, 1
        %s846 = smul.addr %s845, 8
        %s847 = scalar_lea.vmem %s4, %s846
      $region60: #{encoder_block_forward.2} parent=51 // pred_fallthru
        _
      // Predicated region
      $region61: #{encoder_block_forward.2} parent=51 // pred_check
        %p848 = pneg %p177
      $region62: #{encoder_block_forward.2} parent=51 // pred_check_branch
        %850 = sbr.rel (%p848) target = $region64
      $region63: #{encoder_block_forward.2} parent=51 // pred_region
        %p851 = scmp.lt.s32.totalorder %s23, 1
        %s852 = scalar_select %p851, %s23, 1
        %s853 = smul.addr %s852, 8
        %s854 = scalar_lea.vmem %s5, %s853
      $region64: #{encoder_block_forward.2} parent=51 // pred_fallthru
        _
    $region52: #{encoder_block_forward.2} parent=5 // pred_fallthru
      _
  $region6: #{encoder_block_forward.2} parent=0 // loop_footer
    %s16 = sadd.s32 1, %s12
  $region7: #{encoder_block_forward.2} parent=0 // loop_footer_branch
    %11 = sbr.rel target = $region3
  $region8: #{encoder_block_forward.2} parent=0 // loop_exit
    _

// kernel: encoder_block_forward.3
$region0: #{encoder_block_forward.3}
  #allocation0 [shape = 'u32[]', space=smem, size = 0x4, offset = 0x4, fixed_abs, tag = 'smem constant byte address 0x4 - core index']
  #allocation1 [shape = 'u32[144,128]{1,0:T(1,128)}', space=vmem, size = 0x12000, scoped, tag = 'internal scratch']
  %s0 = inlined_call_operand.vmem [shape: f32[2,8,512], index: 0, kind: input, shape index: {}]
  %s1 = inlined_call_operand.vmem [shape: f32[2,8,1], index: 1, kind: input, shape index: {}]
  %s2 = inlined_call_operand.vmem [shape: f32[2,8,1], index: 2, kind: input, shape index: {}]
  %s3 = inlined_call_operand.vmem [shape: f32[2,8,512], index: 3, kind: output, shape index: {}]
  %s4 = sld [smem:[#allocation0]]
  $region45: #{encoder_block_forward.3} parent=0
    _
  %s6 = ssub.s32 1, %s4
  %s7 = scalar_select 0, %s6, %s4
  loop: start=0, step=1, limit=4
  $region2: #{encoder_block_forward.3} parent=0 // loop_pre_header
    _
  $region3: #{encoder_block_forward.3} parent=0 // loop_header
    %s9 = sphi 0, %s13
    %p10 = scmp.ge.s32.totalorder %s9, 4
    %s16 = sphi 0, %s28
    %s17 = sphi 0, %s24
    %s18 = sphi 0, %s16
    %s19 = sphi 0, %s17
    %s20 = sphi 0, %s18
    %s21 = sphi 0, %s19
    %s33 = sphi 0, %s35
    %s36 = sphi 0, %s33
    %s37 = sphi 0, %s36
    %s53 = sphi 0, %s37
    %s59 = sphi 0, %s61
    %s62 = sphi 0, %s59
    %s63 = sphi 0, %s62
    %s79 = sphi 0, %s63
    %s85 = sphi 0, %s87
    %s88 = sphi 0, %s85
    %s89 = sphi 0, %s88
    %s105 = sphi 0, %s89
    %s113 = sphi 0, %s115
    %s116 = sphi 0, %s113
    %s117 = sphi 0, %s116
    %s133 = sphi 0, %s117
  $region4: #{encoder_block_forward.3} parent=0 // loop_header_branch
    %12 = sbr.rel (%p10) target = $region8
  $region5: #{encoder_block_forward.3} parent=0 // loop_body
    %s14 = ssub.s32 %s9, 1
    %s15 = ssub.s32 %s9, 2
    %s22 = sadd.s32 1, %s17
    %p23 = scmp.ge.s32.totalorder %s22, 1
    %s24 = scalar_select %p23, 0, %s22
    %s25 = sadd.s32 1, %s16
    %s26 = scalar_select %p23, %s25, %s16
    %p27 = scmp.ge.s32.totalorder %s26, 2
    %s28 = scalar_select %p27, 0, %s26
    %s29 = ssub.s32 %s16, %s28
    %s30 = ssub.s32 %s17, %s24
    %s31 = sor.u32 %s29, %s30
    %p32 = scmp.eq.s32.totalorder %s31, 0
    %s34 = sadd.s32 %s33, 1
    %s35 = scalar_select %p32, %s33, %s34
    %p38 = pneg %p32
    %p39 = scmp.eq.s32.totalorder %s9, 1
    %p40 = por %p38, %p39
    %p41 = scmp.ne.s32.totalorder %s33, %s36
    %p42 = scmp.eq.s32.totalorder %s9, 0
    %p43 = por %p41, %p42
    %p44 = scmp.ne.s32.totalorder %s33, %s36
    %p45 = scmp.eq.s32.totalorder %s14, 1
    %p46 = por %p44, %p45
    %p47 = scmp.ne.s32.totalorder %s36, %s37
    %p48 = scmp.eq.s32.totalorder %s14, 0
    %p49 = por %p47, %p48
    %p50 = scmp.ne.s32.totalorder %s36, %s37
    %p51 = scmp.eq.s32.totalorder %s15, 1
    %p52 = por %p50, %p51
    %p54 = scmp.ne.s32.totalorder %s37, %s53
    %p55 = scmp.eq.s32.totalorder %s15, 0
    %p56 = por %p54, %p55
    %s57 = ssub.s32 %s16, %s28
    %p58 = scmp.eq.s32.totalorder %s57, 0
    %s60 = sadd.s32 %s59, 1
    %s61 = scalar_select %p58, %s59, %s60
    %p64 = pneg %p58
    %p65 = scmp.eq.s32.totalorder %s9, 1
    %p66 = por %p64, %p65
    %p67 = scmp.ne.s32.totalorder %s59, %s62
    %p68 = scmp.eq.s32.totalorder %s9, 0
    %p69 = por %p67, %p68
    %p70 = scmp.ne.s32.totalorder %s59, %s62
    %p71 = scmp.eq.s32.totalorder %s14, 1
    %p72 = por %p70, %p71
    %p73 = scmp.ne.s32.totalorder %s62, %s63
    %p74 = scmp.eq.s32.totalorder %s14, 0
    %p75 = por %p73, %p74
    %p76 = scmp.ne.s32.totalorder %s62, %s63
    %p77 = scmp.eq.s32.totalorder %s15, 1
    %p78 = por %p76, %p77
    %p80 = scmp.ne.s32.totalorder %s63, %s79
    %p81 = scmp.eq.s32.totalorder %s15, 0
    %p82 = por %p80, %p81
    %s83 = ssub.s32 %s16, %s28
    %p84 = scmp.eq.s32.totalorder %s83, 0
    %s86 = sadd.s32 %s85, 1
    %s87 = scalar_select %p84, %s85, %s86
    %p90 = pneg %p84
    %p91 = scmp.eq.s32.totalorder %s9, 1
    %p92 = por %p90, %p91
    %p93 = scmp.ne.s32.totalorder %s85, %s88
    %p94 = scmp.eq.s32.totalorder %s9, 0
    %p95 = por %p93, %p94
    %p96 = scmp.ne.s32.totalorder %s85, %s88
    %p97 = scmp.eq.s32.totalorder %s14, 1
    %p98 = por %p96, %p97
    %p99 = scmp.ne.s32.totalorder %s88, %s89
    %p100 = scmp.eq.s32.totalorder %s14, 0
    %p101 = por %p99, %p100
    %p102 = scmp.ne.s32.totalorder %s88, %s89
    %p103 = scmp.eq.s32.totalorder %s15, 1
    %p104 = por %p102, %p103
    %p106 = scmp.ne.s32.totalorder %s89, %s105
    %p107 = scmp.eq.s32.totalorder %s15, 0
    %p108 = por %p106, %p107
    %s109 = ssub.s32 %s16, %s28
    %s110 = ssub.s32 %s17, %s24
    %s111 = sor.u32 %s109, %s110
    %p112 = scmp.eq.s32.totalorder %s111, 0
    %s114 = sadd.s32 %s113, 1
    %s115 = scalar_select %p112, %s113, %s114
    %p118 = pneg %p112
    %p119 = scmp.eq.s32.totalorder %s9, 1
    %p120 = por %p118, %p119
    %p121 = scmp.ne.s32.totalorder %s113, %s116
    %p122 = scmp.eq.s32.totalorder %s9, 0
    %p123 = por %p121, %p122
    %p124 = scmp.ne.s32.totalorder %s113, %s116
    %p125 = scmp.eq.s32.totalorder %s14, 1
    %p126 = por %p124, %p125
    %p127 = scmp.ne.s32.totalorder %s116, %s117
    %p128 = scmp.eq.s32.totalorder %s14, 0
    %p129 = por %p127, %p128
    %p130 = scmp.ne.s32.totalorder %s116, %s117
    %p131 = scmp.eq.s32.totalorder %s15, 1
    %p132 = por %p130, %p131
    %p134 = scmp.ne.s32.totalorder %s117, %s133
    %p135 = scmp.eq.s32.totalorder %s15, 0
    %p136 = por %p134, %p135
    %p137 = scmp.le.s32.totalorder 1, %s9
    %p138 = scmp.lt.s32.totalorder %s9, 3
    %p139 = pnand %p137, %p138
    %p140 = pneg %p139
    // Predicated region
    $region9: #{encoder_block_forward.3} parent=5 // pred_check
      _
    $region10: #{encoder_block_forward.3} parent=5 // pred_check_branch
      %142 = sbr.rel (%p139) target = $region12
    $region11: #{encoder_block_forward.3} parent=5 // pred_region
      %s143 = ssub.s32 %s9, 1
    $region12: #{encoder_block_forward.3} parent=5 // pred_fallthru
      _
    %p144 = scmp.lt.s32.totalorder %s9, 2
    // Predicated region
    $region13: #{encoder_block_forward.3} parent=5 // pred_check
      %p145 = pneg %p144
    $region14: #{encoder_block_forward.3} parent=5 // pred_check_branch
      %147 = sbr.rel (%p145) target = $region16
    $region15: #{encoder_block_forward.3} parent=5 // pred_region
      // Predicated region
      $region17: #{encoder_block_forward.3} parent=15 // pred_check
        %p148 = pneg %p43
      $region18: #{encoder_block_forward.3} parent=15 // pred_check_branch
        %150 = sbr.rel (%p148) target = $region20
      $region19: #{encoder_block_forward.3} parent=15 // pred_region
        %s151 = smul.u32 4, %s17
        %p152 = scmp.lt.s32.totalorder %s16, 1
        %s153 = scalar_select %p152, %s16, 1
        %p154 = scmp.lt.s32.totalorder %s151, 3
        %s155 = scalar_select %p154, %s151, 3
        %s156 = smul.addr %s153, 4
        %s157 = sadd.s32 %s155, %s156
        %s158 = smul.addr %s157, 8
        %s159 = scalar_lea.vmem %s0, %s158
        %s160 = smul.u32 4, %s17
      $region20: #{encoder_block_forward.3} parent=15 // pred_fallthru
        _
      // Predicated region
      $region21: #{encoder_block_forward.3} parent=15 // pred_check
        %p161 = pneg %p69
      $region22: #{encoder_block_forward.3} parent=15 // pred_check_branch
        %163 = sbr.rel (%p161) target = $region24
      $region23: #{encoder_block_forward.3} parent=15 // pred_region
        %p164 = scmp.lt.s32.totalorder %s16, 1
        %s165 = scalar_select %p164, %s16, 1
        %s166 = smul.addr %s165, 8
        %s167 = scalar_lea.vmem %s1, %s166
      $region24: #{encoder_block_forward.3} parent=15 // pred_fallthru
        _
      // Predicated region
      $region25: #{encoder_block_forward.3} parent=15 // pred_check
        %p168 = pneg %p95
      $region26: #{encoder_block_forward.3} parent=15 // pred_check_branch
        %170 = sbr.rel (%p168) target = $region28
      $region27: #{encoder_block_forward.3} parent=15 // pred_region
        %p171 = scmp.lt.s32.totalorder %s16, 1
        %s172 = scalar_select %p171, %s16, 1
        %s173 = smul.addr %s172, 8
        %s174 = scalar_lea.vmem %s2, %s173
      $region28: #{encoder_block_forward.3} parent=15 // pred_fallthru
        _
    $region16: #{encoder_block_forward.3} parent=5 // pred_fallthru
      _
    %p175 = scmp.le.s32.totalorder 1, %s9
    %p176 = scmp.lt.s32.totalorder %s9, 3
    %p177 = pnand %p175, %p176
    %p178 = pneg %p177
    // Predicated region
    $region29: #{encoder_block_forward.3} parent=5 // pred_check
      _
    $region30: #{encoder_block_forward.3} parent=5 // pred_check_branch
      %180 = sbr.rel (%p177) target = $region32
    $region31: #{encoder_block_forward.3} parent=5 // pred_region
      %s181 = ssub.s32 %s9, 1
      %s182 = smul.u32 4, %s19
      %p183 = scmp.lt.s32.totalorder %s18, 1
      %s184 = scalar_select %p183, %s18, 1
      %p185 = scmp.lt.s32.totalorder %s182, 3
      %s186 = scalar_select %p185, %s182, 3
      %s187 = smul.addr %s184, 4
      %s188 = sadd.s32 %s186, %s187
      %s189 = smul.addr %s188, 8
      %s190 = scalar_lea.vmem %s0, %s189
      %p191 = pneg %p49
      %p192 = pneg %p46
      %p193 = scmp.lt.s32.totalorder %s18, 1
      %s194 = scalar_select %p193, %s18, 1
      %s195 = smul.addr %s194, 8
      %s196 = scalar_lea.vmem %s1, %s195
      %p197 = pneg %p75
      %p198 = pneg %p72
      %p199 = scmp.lt.s32.totalorder %s18, 1
      %s200 = scalar_select %p199, %s18, 1
      %s201 = smul.addr %s200, 8
      %s202 = scalar_lea.vmem %s2, %s201
      %p203 = pneg %p101
      %p204 = pneg %p98
      %p205 = pneg %p129
      %p206 = pneg %p126
      %s207 = smul.u32 4, %s19
      %p208 = scmp.lt.s32.totalorder %s18, 1
      %s209 = scalar_select %p208, %s18, 1
      %p210 = scmp.lt.s32.totalorder %s207, 3
      %s211 = scalar_select %p210, %s207, 3
      %s212 = smul.addr %s209, 4
      %s213 = sadd.s32 %s211, %s212
      %s214 = smul.addr %s213, 8
      %s215 = scalar_lea.vmem %s3, %s214
      %s216 = smul.u32 4, %s19
      %p217 = scmp.lt.s32.totalorder %s18, 1
      %s218 = scalar_select %p217, %s18, 1
      %p219 = scmp.lt.s32.totalorder %s216, 3
      %s220 = scalar_select %p219, %s216, 3
      %s221 = smul.addr %s218, 4
      %s222 = sadd.s32 %s220, %s221
      %s223 = smul.addr %s222, 8
      %s224 = scalar_lea.vmem %s0, %s223
      %s225 = smul.u32 4, %s19
      %p226 = scmp.lt.s32.totalorder %s18, 1
      %s227 = scalar_select %p226, %s18, 1
      %s228 = smul.addr %s227, 8
      %s229 = scalar_lea.vmem %s1, %s228
      %p230 = scmp.lt.s32.totalorder %s18, 1
      %s231 = scalar_select %p230, %s18, 1
      %s232 = smul.addr %s231, 8
      %s233 = scalar_lea.vmem %s2, %s232
      %s234 = smul.u32 4, %s19
      %p235 = scmp.lt.s32.totalorder %s18, 1
      %s236 = scalar_select %p235, %s18, 1
      %p237 = scmp.lt.s32.totalorder %s234, 3
      %s238 = scalar_select %p237, %s234, 3
      %s239 = smul.addr %s236, 4
      %s240 = sadd.s32 %s238, %s239
      %s241 = smul.addr %s240, 8
      %s242 = scalar_lea.vmem %s3, %s241
      %s243 = smul.u32 4, %s19
      %v244 = vld [vmem:[%s224] sm:$0xff]
      %v245 = vld [vmem:[%s224 + $0x8] sm:$0xff]
      %v246 = vld [vmem:[%s224 + $0x10] sm:$0xff]
      %v247 = vld [vmem:[%s224 + $0x18] sm:$0xff]
      %v248 = vld [vmem:[%s229] sm:$0xff]
      %250 = vset.pattern.permute.xlu0 0
      %251 = vperm.xlu0 %250, %v248
      %v252 = vpop.permute.xlu0 %251
      %v254 = vmul.f32 %v244, %v252
      %v255 = vmul.f32 %v245, %v252
      %v256 = vmul.f32 %v246, %v252
      %v257 = vmul.f32 %v247, %v252
      %v258 = vld [vmem:[%s233] sm:$0xff]
      %260 = vset.pattern.permute.xlu0 0
      %261 = vperm.xlu0 %260, %v258
      %v262 = vpop.permute.xlu0 %261
      %v264 = vadd.f32 %v254, %v262
      %v265 = vadd.f32 %v255, %v262
      %v266 = vadd.f32 %v256, %v262
      %v267 = vadd.f32 %v257, %v262
      %v268 = vmul.f32 %v264, 0.2
      %v269 = vmul.f32 %v265, 0.2
      %v270 = vmul.f32 %v266, 0.2
      %v271 = vmul.f32 %v267, 0.2
      %v272 = vmax.f32 %v264, %v268
      %v273 = vmax.f32 %v265, %v269
      %v274 = vmax.f32 %v266, %v270
      %v275 = vmax.f32 %v267, %v271
      %276 = vst [vmem:[%s242] sm:$0xff] %v272
      %277 = vst [vmem:[%s242 + $0x8] sm:$0xff] %v273
      %278 = vst [vmem:[%s242 + $0x10] sm:$0xff] %v274
      %279 = vst [vmem:[%s242 + $0x18] sm:$0xff] %v275
      %s280 = smul.u32 4, %s19
      %p281 = scmp.lt.s32.totalorder %s18, 1
      %s282 = scalar_select %p281, %s18, 1
      %p283 = scmp.lt.s32.totalorder %s280, 3
      %s284 = scalar_select %p283, %s280, 3
      %s285 = smul.addr %s282, 4
      %s286 = sadd.s32 %s284, %s285
      %s287 = smul.addr %s286, 8
      %s288 = scalar_lea.vmem %s3, %s287
      // Predicated region
      $region33: #{encoder_block_forward.3} parent=31 // pred_check
        %p289 = pneg %p126
      $region34: #{encoder_block_forward.3} parent=31 // pred_check_branch
        %291 = sbr.rel (%p289) target = $region36
      $region35: #{encoder_block_forward.3} parent=31 // pred_region
        %s292 = smul.u32 4, %s19
      $region36: #{encoder_block_forward.3} parent=31 // pred_fallthru
        _
    $region32: #{encoder_block_forward.3} parent=5 // pred_fallthru
      _
    %p293 = scmp.le.s32.totalorder 2, %s9
    // Predicated region
    $region37: #{encoder_block_forward.3} parent=5 // pred_check
      %p294 = pneg %p293
    $region38: #{encoder_block_forward.3} parent=5 // pred_check_branch
      %296 = sbr.rel (%p294) target = $region40
    $region39: #{encoder_block_forward.3} parent=5 // pred_region
      %s297 = ssub.s32 %s9, 2
      // Predicated region
      $region41: #{encoder_block_forward.3} parent=39 // pred_check
        %p298 = pneg %p132
      $region42: #{encoder_block_forward.3} parent=39 // pred_check_branch
        %300 = sbr.rel (%p298) target = $region44
      $region43: #{encoder_block_forward.3} parent=39 // pred_region
        %s301 = smul.u32 4, %s21
        %p302 = scmp.lt.s32.totalorder %s20, 1
        %s303 = scalar_select %p302, %s20, 1
        %p304 = scmp.lt.s32.totalorder %s301, 3
        %s305 = scalar_select %p304, %s301, 3
        %s306 = smul.addr %s303, 4
        %s307 = sadd.s32 %s305, %s306
        %s308 = smul.addr %s307, 8
        %s309 = scalar_lea.vmem %s3, %s308
      $region44: #{encoder_block_forward.3} parent=39 // pred_fallthru
        _
    $region40: #{encoder_block_forward.3} parent=5 // pred_fallthru
      _
  $region6: #{encoder_block_forward.3} parent=0 // loop_footer
    %s13 = sadd.s32 1, %s9
  $region7: #{encoder_block_forward.3} parent=0 // loop_footer_branch
    %8 = sbr.rel target = $region3
  $region8: #{encoder_block_forward.3} parent=0 // loop_exit
    _

</llo_original>
